<compile_context>
chip_gen: v5e
topology: v5e:2x2
jax: 0.10.0
libtpu: 0.0.40
codegen_flags: <defaults>
</compile_context>

<pallas_src>
import functools

import jax
import jax.numpy as jnp
from jax.experimental import pallas as pl
from jax.experimental.pallas import tpu as pltpu


# ---------------------------------------------------------------------------
# Kernels
# ---------------------------------------------------------------------------

def _adain_fused_kernel(x_ref, gb_ref, o_ref, *, eps, hw):
    """One (TB, HW) slab of rows: fused stats + single-FMA modulate.

    x_ref : (TB, HW) input rows (one row per (n, c) instance)
    gb_ref: (TB, 2) f32, columns = (1 + gamma, beta)
    o_ref : (TB, HW) output
    """
    x = x_ref[...].astype(jnp.float32)                      # (TB, HW)
    # One elementwise pass for both reductions.
    s1 = jnp.sum(x, axis=-1, keepdims=True)                 # (TB, 1)
    s2 = jnp.sum(x * x, axis=-1, keepdims=True)             # (TB, 1)
    mean = s1 * (1.0 / hw)
    var = jnp.maximum(s2 * (1.0 / hw) - mean * mean, 0.0)   # biased variance
    a = gb_ref[:, 0:1] * jax.lax.rsqrt(var + eps)           # (1+gamma)/sqrt(var+eps)
    c = gb_ref[:, 1:2] - a * mean                           # beta - a*mean
    o_ref[...] = (x * a + c).astype(o_ref.dtype)            # one FMA per element


def _stats_kernel(x_ref, gb_ref, ac_ref, s1_ref, s2_ref, *, eps, hw, thw):
    """Large-HW path, sweep 1: accumulate per-row sums over H*W tiles and emit
    per-row (a, c) = ((1+gamma)*rsqrt(var+eps), beta - a*mean)."""
    k = pl.program_id(1)

    @pl.when(k == 0)
    def _():
        s1_ref[...] = jnp.zeros_like(s1_ref)
        s2_ref[...] = jnp.zeros_like(s2_ref)

    x = x_ref[...].astype(jnp.float32)                      # (TB, THW)
    # Mask a ragged final H*W tile (padded lanes may hold garbage).
    col = k * thw + jax.lax.broadcasted_iota(jnp.int32, x.shape, 1)
    xm = jnp.where(col < hw, x, 0.0)
    s1_ref[...] += jnp.sum(xm, axis=-1, keepdims=True)
    s2_ref[...] += jnp.sum(xm * xm, axis=-1, keepdims=True)

    @pl.when(k == pl.num_programs(1) - 1)
    def _():
        mean = s1_ref[...] * (1.0 / hw)
        var = jnp.maximum(s2_ref[...] * (1.0 / hw) - mean * mean, 0.0)
        a = gb_ref[:, 0:1] * jax.lax.rsqrt(var + eps)
        ac_ref[:, 0:1] = a
        ac_ref[:, 1:2] = gb_ref[:, 1:2] - a * mean


def _apply_kernel(x_ref, ac_ref, o_ref):
    """Large-HW path, sweep 2: out = x * a + c (pure streaming FMA)."""
    x = x_ref[...].astype(jnp.float32)
    o_ref[...] = (x * ac_ref[:, 0:1] + ac_ref[:, 1:2]).astype(o_ref.dtype)


# ---------------------------------------------------------------------------
# Wrapper
# ---------------------------------------------------------------------------

def _round_up(v, m):
    return ((v + m - 1) // m) * m


def adain(x, s, fc_weight, fc_bias, eps=1e-5, *,
          block_bytes=2 * 1024 * 1024,
          vmem_limit_bytes=32 * 1024 * 1024):
    """AdaIN forward. x: (N,C,H,W); s: (N,D); fc_weight: (2C,D); fc_bias: (2C,)."""
    N, C, H, W = x.shape
    NC, HW = N * C, H * W
    eps = float(eps)

    # --- style FC: tiny (N,D)@(D,2C) — plain XLA dot on the MXU -------------
    h = jnp.dot(s, fc_weight.T, precision=jax.lax.Precision.HIGHEST,
                preferred_element_type=jnp.float32) + fc_bias.astype(jnp.float32)
    gamma, beta = h[:, :C], h[:, C:]                         # static split (= chunk)
    # Pack (1+gamma, beta) into one (NC, 2) f32 side input.
    gb = jnp.stack([1.0 + gamma, beta], axis=-1).reshape(NC, 2)

    # --- instance norm + modulation over (N*C, H*W) rows --------------------
    x2 = x.reshape(NC, HW)                                   # free contiguous reshape

    # Block sizing: budget counted at 4 B/elem regardless of input dtype so the
    # f32 internals are covered; keeps double-buffered in+out blocks plus
    # scratch well inside the explicit 32 MiB scoped-VMEM limit on all gens.
    row_bytes = HW * 4
    max_rows = block_bytes // max(row_bytes, 1)
    use_split = (max_rows < 8) and (HW >= 128)               # 8-row slab doesn't fit

    cparams = functools.partial(pltpu.CompilerParams,
                                vmem_limit_bytes=vmem_limit_bytes)

    if not use_split:
        # Fused single-pass path: a full (TB, HW) row slab fits in one block.
        if NC <= max_rows:
            # >= 2 grid steps when possible so v7x's 2 TCs both get work.
            TB = min(NC, _round_up(pl.cdiv(NC, 2), 8))
        else:
            TB = min(NC, max(8, (max_rows // 8) * 8))
        grid = (pl.cdiv(NC, TB),)
        out = pl.pallas_call(
            functools.partial(_adain_fused_kernel, eps=eps, hw=HW),
            out_shape=jax.ShapeDtypeStruct((NC, HW), x.dtype),
            grid=grid,
            in_specs=[
                pl.BlockSpec((TB, HW), lambda i: (i, 0)),
                pl.BlockSpec((TB, 2), lambda i: (i, 0)),
            ],
            out_specs=pl.BlockSpec((TB, HW), lambda i: (i, 0)),
            compiler_params=cparams(dimension_semantics=("parallel",)),
        )(x2, gb)
    else:
        # Large-spatial path: tile H*W as well (reduction axis last in grid).
        TB = min(NC, 8)
        max_thw = block_bytes // (TB * 4)
        THW = max(128, (max_thw // 128) * 128)
        KH = pl.cdiv(HW, THW)
        grid = (pl.cdiv(NC, TB), KH)

        ac = pl.pallas_call(
            functools.partial(_stats_kernel, eps=eps, hw=HW, thw=THW),
            out_shape=jax.ShapeDtypeStruct((NC, 2), jnp.float32),
            grid=grid,
            in_specs=[
                pl.BlockSpec((TB, THW), lambda i, k: (i, k)),
                pl.BlockSpec((TB, 2), lambda i, k: (i, 0)),
            ],
            out_specs=pl.BlockSpec((TB, 2), lambda i, k: (i, 0)),
            scratch_shapes=[pltpu.VMEM((TB, 1), jnp.float32),
                            pltpu.VMEM((TB, 1), jnp.float32)],
            compiler_params=cparams(dimension_semantics=("parallel", "arbitrary")),
        )(x2, gb)

        out = pl.pallas_call(
            _apply_kernel,
            out_shape=jax.ShapeDtypeStruct((NC, HW), x.dtype),
            grid=grid,
            in_specs=[
                pl.BlockSpec((TB, THW), lambda i, k: (i, k)),
                pl.BlockSpec((TB, 2), lambda i, k: (i, 0)),
            ],
            out_specs=pl.BlockSpec((TB, THW), lambda i, k: (i, k)),
            compiler_params=cparams(dimension_semantics=("parallel", "parallel")),
        )(x2, ac)

    return out.reshape(N, C, H, W)


def adain_reference(x, s, fc_weight, fc_bias, eps=1e-5):
    """Plain-JAX reference mirroring the PyTorch AdaIN forward."""
    N, C, H, W = x.shape
    h = jnp.dot(s, fc_weight.T, precision=jax.lax.Precision.HIGHEST) + fc_bias
    h = h.reshape(N, 2 * C, 1, 1)
    gamma, beta = h[:, :C], h[:, C:]
    mean = x.mean(axis=(2, 3), keepdims=True)
    var = ((x - mean) ** 2).mean(axis=(2, 3), keepdims=True)
    x_hat = (x - mean) / jnp.sqrt(var + eps)
    return (1.0 + gamma) * x_hat + beta


if __name__ == "__main__":
    key = jax.random.PRNGKey(0)
    N, C, H, W = 2, 4, 16, 16
    style_dim = 16
    k1, k2, k3, k4 = jax.random.split(key, 4)
    x = jax.random.normal(k1, (N, C, H, W), dtype=jnp.float32)
    s = jax.random.normal(k2, (N, style_dim), dtype=jnp.float32)
    fc_weight = 0.1 * jax.random.normal(k3, (2 * C, style_dim), dtype=jnp.float32)
    fc_bias = 0.1 * jax.random.normal(k4, (2 * C,), dtype=jnp.float32)

    y_ref = adain_reference(x, s, fc_weight, fc_bias)

    # Default (fused single-pass) path.
    y = jax.block_until_ready(adain(x, s, fc_weight, fc_bias))
    assert y.shape == (N, C, H, W)
    assert jnp.allclose(y, y_ref, atol=1e-5, rtol=1e-5), "fused path mismatch"

    # Force the large-spatial (H*W-tiled) two-sweep path with a tiny block
    # budget so it is exercised and validated as well.
    y2 = jax.block_until_ready(adain(x, s, fc_weight, fc_bias, block_bytes=4096))
    assert jnp.allclose(y2, y_ref, atol=1e-5, rtol=1e-5), "split path mismatch"

    print("KERNEL_OK")
</pallas_src>

<mosaic_0001>
module attributes {stable_mosaic.version = 11 : i64} {
  func.func @_adain_fused_kernel(%arg0: i32, %arg1: memref<8x256xf32, #tpu.memory_space<vmem>>, %arg2: memref<8x2xf32, #tpu.memory_space<vmem>>, %arg3: memref<8x256xf32, #tpu.memory_space<vmem>>) attributes {dimension_semantics = [#tpu.dimension_semantics<parallel>], iteration_bounds = array<i64: 1>, scalar_prefetch = 0 : i64, scratch_operands = 0 : i64, tpu.core_type = #tpu.core_type<tc>, window_params = [{transform_indices = @transform_0, window_bounds = array<i64: 8, 256>}, {transform_indices = @transform_1, window_bounds = array<i64: 8, 2>}, {transform_indices = @transform_2, window_bounds = array<i64: 8, 256>}]} {
    %c0 = arith.constant 0 : index
    %c0_0 = arith.constant 0 : index
    %0 = vector.load %arg1[%c0, %c0_0] : memref<8x256xf32, #tpu.memory_space<vmem>>, vector<8x256xf32>
    %cst = arith.constant dense<0.000000e+00> : vector<8xf32>
    %1 = vector.multi_reduction <add>, %0, %cst [1] : vector<8x256xf32> to vector<8xf32>
    %2 = vector.shape_cast %1 : vector<8xf32> to vector<8x1xf32>
    %3 = arith.mulf %0, %0 : vector<8x256xf32>
    %cst_1 = arith.constant dense<0.000000e+00> : vector<8xf32>
    %4 = vector.multi_reduction <add>, %3, %cst_1 [1] : vector<8x256xf32> to vector<8xf32>
    %5 = vector.shape_cast %4 : vector<8xf32> to vector<8x1xf32>
    %cst_2 = arith.constant 3.906250e-03 : f32
    %6 = vector.broadcast %cst_2 : f32 to vector<8x1xf32>
    %7 = arith.mulf %2, %6 : vector<8x1xf32>
    %cst_3 = arith.constant 3.906250e-03 : f32
    %8 = vector.broadcast %cst_3 : f32 to vector<8x1xf32>
    %9 = arith.mulf %5, %8 : vector<8x1xf32>
    %10 = arith.mulf %7, %7 : vector<8x1xf32>
    %11 = arith.subf %9, %10 : vector<8x1xf32>
    %cst_4 = arith.constant 0.000000e+00 : f32
    %12 = vector.broadcast %cst_4 : f32 to vector<8x1xf32>
    %13 = arith.maximumf %11, %12 : vector<8x1xf32>
    %c0_5 = arith.constant 0 : index
    %c0_6 = arith.constant 0 : index
    %14 = vector.load %arg2[%c0_5, %c0_6] : memref<8x2xf32, #tpu.memory_space<vmem>>, vector<8x1xf32>
    %cst_7 = arith.constant 9.99999974E-6 : f32
    %15 = vector.broadcast %cst_7 : f32 to vector<8x1xf32>
    %16 = arith.addf %13, %15 : vector<8x1xf32>
    %17 = math.rsqrt %16 : vector<8x1xf32>
    %18 = arith.mulf %14, %17 : vector<8x1xf32>
    %c0_8 = arith.constant 0 : index
    %c1 = arith.constant 1 : index
    %19 = vector.load %arg2[%c0_8, %c1] : memref<8x2xf32, #tpu.memory_space<vmem>>, vector<8x1xf32>
    %20 = arith.mulf %18, %7 : vector<8x1xf32>
    %21 = arith.subf %19, %20 : vector<8x1xf32>
    %22 = vector.broadcast %18 : vector<8x1xf32> to vector<8x256xf32>
    %23 = arith.mulf %0, %22 : vector<8x256xf32>
    %24 = vector.broadcast %21 : vector<8x1xf32> to vector<8x256xf32>
    %25 = arith.addf %23, %24 : vector<8x256xf32>
    %c0_9 = arith.constant 0 : index
    %c0_10 = arith.constant 0 : index
    %26 = vector.load %arg3[%c0_9, %c0_10] : memref<8x256xf32, #tpu.memory_space<vmem>>, vector<8x256xf32>
    tpu.vector_store %arg3[%c0_9, %c0_10], %25 {strides = array<i32>} : memref<8x256xf32, #tpu.memory_space<vmem>>, vector<8x256xf32>,
    return
  }
  func.func @transform_0(%arg0: i32) -> (i32, i32) {
    %c0_i32 = arith.constant 0 : i32
    %c0_i32_0 = arith.constant 0 : i32
    return %arg0, %c0_i32 : i32, i32
  }
  func.func @transform_1(%arg0: i32) -> (i32, i32) {
    %c0_i32 = arith.constant 0 : i32
    %c0_i32_0 = arith.constant 0 : i32
    return %arg0, %c0_i32 : i32, i32
  }
  func.func @transform_2(%arg0: i32) -> (i32, i32) {
    %c0_i32 = arith.constant 0 : i32
    %c0_i32_0 = arith.constant 0 : i32
    return %arg0, %c0_i32 : i32, i32
  }
}

</mosaic_0001>

<llo_original>
// kernel: tpu_custom_call.1
$region0: #{tpu_custom_call.1}
  #allocation0 [shape = 'u32[]', space=smem, size = 0x4, offset = 0x4, fixed_abs, tag = 'smem constant byte address 0x4 - core index']
  #allocation1 [shape = 'u32[72,128]{1,0:T(1,128)}', space=vmem, size = 0x9000, scoped, tag = 'internal scratch']
  %s0 = inlined_call_operand.hbm [shape: f32[8,256], index: 0, kind: input, shape index: {}]
  %s1 = inlined_call_operand.vmem [shape: f32[8,2], index: 1, kind: input, shape index: {}]
  %s2 = inlined_call_operand.hbm [shape: f32[8,256], index: 2, kind: output, shape index: {}]
  %s3 = sld [smem:[#allocation0]]
  $region22: #{tpu_custom_call.1} parent=0
    _
  %s5 = ssub.s32 1, %s3
  %s6 = scalar_select 0, %s5, %s3
  $region1: #{tpu_custom_call.1} parent=0
    #allocation2 [shape = 'u8[8192]{0}', space=vmem, size = 0x2000, scoped, tag = 'input window, operand 0, single buffered']
    #allocation3 [shape = 's32[1]{0}', space=sflag, size = 0x4, scoped, tag = 'scoped memory for tpu_custom_call.1']
    #allocation4 [shape = 's32[1]{0}', space=sflag, size = 0x4, scoped, tag = 'scoped memory for tpu_custom_call.1']
    #allocation5 [shape = 'u8[8192]{0}', space=vmem, size = 0x2000, scoped, tag = 'output window, operand 0, single buffered']
    %7 = vsyncpa [#allocation3], 0
    %8 = vsyncpa [#allocation4], 0
    // Predicated region
    $region2: #{tpu_custom_call.1} parent=1 // pred_check
      _
    $region3: #{tpu_custom_call.1} parent=1 // pred_check_branch
      %10 = sbr.rel (0) target = $region5
    $region4: #{tpu_custom_call.1} parent=1 // pred_region
      %12 = vsyncadd [#allocation3], 0
      %s14 = sshll.u32 %s0, 4
      %s15 = int_to_ptr.hbm [resolvable:$true] %s14
      %s16 = sshll.u32 [#allocation2], 4
      %s17 = int_to_ptr.vmem [resolvable:$true] %s16
      %19 = dma.hbm_to_vmem [thread:$0]  %s15, 256, %s17, [#allocation3]
    $region5: #{tpu_custom_call.1} parent=1 // pred_fallthru
      _
    // Predicated region
    $region6: #{tpu_custom_call.1} parent=1 // pred_check
      _
    $region7: #{tpu_custom_call.1} parent=1 // pred_check_branch
      %21 = sbr.rel (0) target = $region9
    $region8: #{tpu_custom_call.1} parent=1 // pred_region
      _
    $region9: #{tpu_custom_call.1} parent=1 // pred_fallthru
      _
    // Predicated region
    $region10: #{tpu_custom_call.1} parent=1 // pred_check
      _
    $region11: #{tpu_custom_call.1} parent=1 // pred_check_branch
      %23 = sbr.rel (0) target = $region13
    $region12: #{tpu_custom_call.1} parent=1 // pred_region
      %25 = dma.done [#allocation3], 256
    $region13: #{tpu_custom_call.1} parent=1 // pred_fallthru
      _
    %v26 = vld [vmem:[#allocation2] sm:$0xff]
    %v27 = vld [vmem:[#allocation2 + $0x8] sm:$0xff]
    %v28 = vadd.f32 %v26, %v27
    %29 = vadd.xlane.f32.xlu0 %v28
    %v30 = vpop.xlane.xlu0 %29
    %v31 = vmul.f32 %v26, %v26
    %v32 = vmul.f32 %v27, %v27
    %v33 = vadd.f32 %v31, %v32
    %34 = vadd.xlane.f32.xlu0 %v33
    %v35 = vpop.xlane.xlu0 %34
    %v36 = vmul.f32 %v30, 0.00390625
    %v37 = vmul.f32 %v35, 0.00390625
    %v38 = vmul.f32 %v36, %v36
    %v39 = vsub.f32 %v37, %v38
    %v40 = vmax.f32 %v39, 0.0
    %v41 = vld [vmem:[%s1] sm:$0xff]
    %v42 = vadd.f32 %v40, 1e-05
    %v43 = vrsqrt.pop %v42
    %v44 = vmul.f32 %v43, %v42
    %v45 = vmul.f32 %v44, %v43
    %v46 = vmul.f32 0.5, %v45
    %v47 = vsub.f32 1.5, %v46
    %v48 = vmul.f32 %v43, %v47
    %vm49 = vweird.f32 %v42
    %vm50 = vweird.f32 %v43
    %vm51 = vmor %vm49, %vm50
    %v52 = vsel %vm51, %v43, %v48
    %v53 = vmul.f32 %v41, %v52
    %v54 = vmul.f32 %v53, %v36
    %56 = vrot.lane.b32.xlu0 %v54, 1
    %v57 = vpop.permute.xlu0 %56
    %v59 = vsub.f32 %v41, %v57
    %61 = vset.pattern.permute.xlu0 0
    %62 = vperm.xlu0 %61, %v53
    %v63 = vpop.permute.xlu0 %62
    %v65 = vmul.f32 %v26, %v63
    %v66 = vmul.f32 %v27, %v63
    %68 = vset.pattern.permute.xlu0 1
    %69 = vperm.xlu0 %68, %v59
    %v70 = vpop.permute.xlu0 %69
    %v72 = vadd.f32 %v65, %v70
    %v73 = vadd.f32 %v66, %v70
    %74 = vst [vmem:[#allocation5] sm:$0xff] %v72
    %75 = vst [vmem:[#allocation5 + $0x8] sm:$0xff] %v73
    // Predicated region
    $region14: #{tpu_custom_call.1} parent=1 // pred_check
      _
    $region15: #{tpu_custom_call.1} parent=1 // pred_check_branch
      %77 = sbr.rel (0) target = $region17
    $region16: #{tpu_custom_call.1} parent=1 // pred_region
      %79 = vsyncadd [#allocation4], 0
      %s81 = sshll.u32 [#allocation5], 4
      %s82 = int_to_ptr.vmem [resolvable:$true] %s81
      %s83 = sshll.u32 %s2, 4
      %s84 = int_to_ptr.hbm [resolvable:$true] %s83
      %86 = dma.vmem_to_hbm [thread:$0]  %s82, 256, %s84, [#allocation4]
    $region17: #{tpu_custom_call.1} parent=1 // pred_fallthru
      _
    // Predicated region
    $region18: #{tpu_custom_call.1} parent=1 // pred_check
      _
    $region19: #{tpu_custom_call.1} parent=1 // pred_check_branch
      %88 = sbr.rel (0) target = $region21
    $region20: #{tpu_custom_call.1} parent=1 // pred_region
      %90 = dma.done [#allocation4], 256
    $region21: #{tpu_custom_call.1} parent=1 // pred_fallthru
      _
    %91 = vsyncpa [#allocation3], 1
    %92 = vsyncpa [#allocation4], 1

</llo_original>
